<compile_context>
chip_gen: v6e
topology: v6e:2x2x1
jax: 0.10.0
libtpu: 0.0.40
codegen_flags: <defaults>
</compile_context>

<pallas_src>
import jax
import jax.numpy as jnp
from jax.experimental import pallas as pl
from jax.experimental.pallas import tpu as pltpu

_INV_1P1 = 1.0 / 1.1          # precomputed constant: single vmul instead of a divide
_LANES = 128
_MAX_TILE_BYTES = 1 << 20     # ~1 MiB per tile; x4 for double-buffered in+out


def _swish_kernel(sp_ref, x_ref, o_ref):
    # sp_ref holds softplus(beta), precomputed in the wrapper (SMEM scalar).
    sp = sp_ref[0, 0]
    x = x_ref[...].astype(jnp.float32)
    sig = jax.nn.sigmoid(x * sp)                      # exp + reciprocal on EUP
    o_ref[...] = (x * sig * _INV_1P1).astype(o_ref.dtype)


def swish(x: jax.Array, beta: jax.Array) -> jax.Array:
    """Elementwise Swish with learnable beta. Works for any shape/dtype."""
    orig_shape = x.shape
    total = x.size
    itemsize = jnp.dtype(x.dtype).itemsize
    # Minimum sublane granularity: 8 rows for 32-bit, 16 for 16-bit dtypes.
    sub = 8 * (4 // max(itemsize, 1)) if itemsize < 4 else 8
    sub = 16 if itemsize == 2 else 8

    rows = pl.cdiv(total, _LANES)

    # Largest block that keeps double-buffered in+out comfortably inside
    # scoped VMEM on every generation (v5e 16 MiB default is the tightest).
    max_block_rows = max(sub, (_MAX_TILE_BYTES // (_LANES * itemsize)) // sub * sub)
    if rows <= max_block_rows:
        block_rows = ((rows + sub - 1) // sub) * sub   # single block
    else:
        block_rows = max_block_rows

    rows_padded = ((rows + block_rows - 1) // block_rows) * block_rows
    pad = rows_padded * _LANES - total

    xf = x.reshape(-1)
    if pad:
        xf = jnp.pad(xf, (0, pad))
    x2d = xf.reshape(rows_padded, _LANES)

    # Hoist softplus(beta) out of the kernel; pass it as an SMEM scalar.
    sp = jnp.log1p(jnp.exp(beta.astype(jnp.float32))).reshape(1, 1)

    grid = (rows_padded // block_rows,)

    out2d = pl.pallas_call(
        _swish_kernel,
        out_shape=jax.ShapeDtypeStruct((rows_padded, _LANES), x.dtype),
        grid_spec=pltpu.PrefetchScalarGridSpec(
            num_scalar_prefetch=0,
            grid=grid,
            in_specs=[
                pl.BlockSpec(memory_space=pltpu.MemorySpace.SMEM),      # softplus(beta)
                pl.BlockSpec((block_rows, _LANES), lambda i: (i, 0)),   # x tile
            ],
            out_specs=pl.BlockSpec((block_rows, _LANES), lambda i: (i, 0)),
        ),
        compiler_params=pltpu.CompilerParams(
            dimension_semantics=("parallel",),   # megacore sharding for large inputs
        ),
    )(sp, x2d)

    out = out2d.reshape(-1)
    if pad:
        out = out[:total]
    return out.reshape(orig_shape)


def swish_ref(x, beta):
    sp = jnp.log1p(jnp.exp(beta))
    return (x * jax.nn.sigmoid(x * sp)) / 1.1


if __name__ == "__main__":
    key = jax.random.PRNGKey(0)
    # NCHW input consistent with the conv-style usage of this activation.
    x = jax.random.normal(key, (2, 4, 16, 16), dtype=jnp.float32)
    # Deterministic parameter init matching nn.Parameter(torch.tensor([0.5])).
    beta = jnp.array([0.5], dtype=jnp.float32)

    out = swish(x, beta)
    out = jax.block_until_ready(out)

    ref = swish_ref(x, beta.reshape(()))
    assert out.shape == x.shape and out.dtype == x.dtype
    assert jnp.allclose(out, ref, atol=1e-6, rtol=1e-6)

    print("KERNEL_OK")
</pallas_src>

<mosaic_0001>
module attributes {stable_mosaic.version = 11 : i64} {
  func.func @_swish_kernel(%arg0: i32, %arg1: memref<1x1xf32, #tpu.memory_space<smem>>, %arg2: memref<16x128xf32, #tpu.memory_space<vmem>>, %arg3: memref<16x128xf32, #tpu.memory_space<vmem>>) attributes {dimension_semantics = [#tpu.dimension_semantics<parallel>], iteration_bounds = array<i64: 1>, scalar_prefetch = 0 : i64, scratch_operands = 0 : i64, tpu.core_type = #tpu.core_type<tc>, window_params = [{transform_indices = @transform_0, window_bounds = array<i64: 1, 1>}, {transform_indices = @transform_1, window_bounds = array<i64: 16, 128>}, {transform_indices = @transform_2, window_bounds = array<i64: 16, 128>}]} {
    %c0 = arith.constant 0 : index
    %c0_0 = arith.constant 0 : index
    %0 = memref.load %arg1[%c0, %c0_0] : memref<1x1xf32, #tpu.memory_space<smem>>
    %c0_1 = arith.constant 0 : index
    %c0_2 = arith.constant 0 : index
    %1 = vector.load %arg2[%c0_1, %c0_2] : memref<16x128xf32, #tpu.memory_space<vmem>>, vector<16x128xf32>
    %2 = vector.broadcast %0 : f32 to vector<16x128xf32>
    %3 = arith.mulf %1, %2 : vector<16x128xf32>
    %4 = arith.negf %3 : vector<16x128xf32>
    %5 = math.exp %4 : vector<16x128xf32>
    %cst = arith.constant 1.000000e+00 : f32
    %6 = vector.broadcast %cst : f32 to vector<16x128xf32>
    %7 = arith.addf %6, %5 : vector<16x128xf32>
    %8 = arith.divf %6, %7 : vector<16x128xf32>
    %9 = arith.mulf %1, %8 : vector<16x128xf32>
    %cst_3 = arith.constant 0.909090936 : f32
    %10 = vector.broadcast %cst_3 : f32 to vector<16x128xf32>
    %11 = arith.mulf %9, %10 : vector<16x128xf32>
    %c0_4 = arith.constant 0 : index
    %c0_5 = arith.constant 0 : index
    %12 = vector.load %arg3[%c0_4, %c0_5] : memref<16x128xf32, #tpu.memory_space<vmem>>, vector<16x128xf32>
    tpu.vector_store %arg3[%c0_4, %c0_5], %11 {strides = array<i32>} : memref<16x128xf32, #tpu.memory_space<vmem>>, vector<16x128xf32>,
    return
  }
  func.func @transform_0(%arg0: i32) -> (i32, i32) {
    %c0_i32 = arith.constant 0 : i32
    %c0_i32_0 = arith.constant 0 : i32
    %c0_i32_1 = arith.constant 0 : i32
    return %c0_i32, %c0_i32_0 : i32, i32
  }
  func.func @transform_1(%arg0: i32) -> (i32, i32) {
    %c0_i32 = arith.constant 0 : i32
    %c0_i32_0 = arith.constant 0 : i32
    return %arg0, %c0_i32 : i32, i32
  }
  func.func @transform_2(%arg0: i32) -> (i32, i32) {
    %c0_i32 = arith.constant 0 : i32
    %c0_i32_0 = arith.constant 0 : i32
    return %arg0, %c0_i32 : i32, i32
  }
}

</mosaic_0001>

<llo_original>
// kernel: tpu_custom_call.1
$region0: #{tpu_custom_call.1}
  #allocation0 [shape = 'u32[]', space=smem, size = 0x4, offset = 0x4, fixed_abs, tag = 'smem constant byte address 0x4 - core index']
  #allocation1 [shape = 'u32[144,128]{1,0:T(1,128)}', space=vmem, size = 0x12000, scoped, tag = 'internal scratch']
  #allocation2 [shape = 'f32[1,1]{1,0:T(1,128)S(6)}', space=smem, size = 0x200, scoped, tag = 'scoped memory for tpu_custom_call.1']
  %s0 = inlined_call_operand.<no memory space> [shape: f32[1,1], index: 0, kind: input, shape index: {}]
  %s1 = inlined_call_operand.hbm [shape: f32[16,128], index: 1, kind: input, shape index: {}]
  %s2 = inlined_call_operand.hbm [shape: f32[16,128], index: 2, kind: output, shape index: {}]
  %s3 = sld [smem:[#allocation0]]
  $region22: #{tpu_custom_call.1} parent=0
    _
  %s5 = ssub.s32 1, %s3
  %s6 = scalar_select 0, %s5, %s3
  %7 = sst [smem:[#allocation2]] %s0
  $region1: #{tpu_custom_call.1} parent=0
    #allocation3 [shape = 'u8[8192]{0}', space=vmem, size = 0x2000, scoped, tag = 'input window, operand 1, single buffered']
    #allocation4 [shape = 's32[1]{0}', space=sflag, size = 0x4, scoped, tag = 'scoped memory for tpu_custom_call.1']
    #allocation5 [shape = 's32[1]{0}', space=sflag, size = 0x4, scoped, tag = 'scoped memory for tpu_custom_call.1']
    #allocation6 [shape = 'u8[8192]{0}', space=vmem, size = 0x2000, scoped, tag = 'output window, operand 0, single buffered']
    %8 = vsyncpa [#allocation4], 0
    %9 = vsyncpa [#allocation5], 0
    // Predicated region
    $region2: #{tpu_custom_call.1} parent=1 // pred_check
      _
    $region3: #{tpu_custom_call.1} parent=1 // pred_check_branch
      %11 = sbr.rel (0) target = $region5
    $region4: #{tpu_custom_call.1} parent=1 // pred_region
      _
    $region5: #{tpu_custom_call.1} parent=1 // pred_fallthru
      _
    // Predicated region
    $region6: #{tpu_custom_call.1} parent=1 // pred_check
      _
    $region7: #{tpu_custom_call.1} parent=1 // pred_check_branch
      %13 = sbr.rel (0) target = $region9
    $region8: #{tpu_custom_call.1} parent=1 // pred_region
      %s15 = ssub.s32 256, 256
      %16 = vsyncadd [#allocation4], %s15
      %s17 = sshll.u32 [#allocation3], 4
      %s18 = int_to_ptr.vmem [resolvable:$true] %s17
      %23 = dma.hbm_to_vmem [thread:$0]  %s1, 256, %s18, [#allocation4], 128, 128, 8
    $region9: #{tpu_custom_call.1} parent=1 // pred_fallthru
      _
    // Predicated region
    $region10: #{tpu_custom_call.1} parent=1 // pred_check
      _
    $region11: #{tpu_custom_call.1} parent=1 // pred_check_branch
      %25 = sbr.rel (0) target = $region13
    $region12: #{tpu_custom_call.1} parent=1 // pred_region
      %26 = dma.done [#allocation4], 256
    $region13: #{tpu_custom_call.1} parent=1 // pred_fallthru
      _
    %s27 = sld [smem:[#allocation2]]
    %v28 = vld [vmem:[#allocation3] sm:$0xff]
    %v29 = vld [vmem:[#allocation3 + $0x8] sm:$0xff]
    %v30 = vstv %s27
    %v31 = vmul.f32 %v28, %v30
    %v32 = vmul.f32 %v29, %v30
    %v33 = vxor.u32 %v31, 2147483648
    %v34 = vxor.u32 %v32, 2147483648
    %v35 = vmul.f32 %v33, 1.442695
    %v36 = vpow.pop %v35
    %v37 = vmul.f32 %v34, 1.442695
    %v38 = vpow.pop %v37
    %v39 = vadd.f32 %v36, 1.0
    %v40 = vadd.f32 %v38, 1.0
    %v41 = vrcp.pop %v39
    %v42 = vmul.f32 1.0, %v41
    %v43 = vrcp.pop %v40
    %v44 = vmul.f32 1.0, %v43
    %v45 = vmul.f32 %v28, %v42
    %v46 = vmul.f32 %v29, %v44
    %v47 = vmul.f32 %v45, 0.90909094
    %v48 = vmul.f32 %v46, 0.90909094
    %49 = vst [vmem:[#allocation6] sm:$0xff] %v47
    %50 = vst [vmem:[#allocation6 + $0x8] sm:$0xff] %v48
    // Predicated region
    $region14: #{tpu_custom_call.1} parent=1 // pred_check
      _
    $region15: #{tpu_custom_call.1} parent=1 // pred_check_branch
      %52 = sbr.rel (0) target = $region17
    $region16: #{tpu_custom_call.1} parent=1 // pred_region
      %s54 = ssub.s32 256, 256
      %55 = vsyncadd [#allocation5], %s54
      %s56 = sshll.u32 [#allocation6], 4
      %s57 = int_to_ptr.vmem [resolvable:$true] %s56
      %62 = dma.vmem_to_hbm [thread:$0]  %s57, 256, %s2, [#allocation5], 128, 128, 8
    $region17: #{tpu_custom_call.1} parent=1 // pred_fallthru
      _
    // Predicated region
    $region18: #{tpu_custom_call.1} parent=1 // pred_check
      _
    $region19: #{tpu_custom_call.1} parent=1 // pred_check_branch
      %64 = sbr.rel (0) target = $region21
    $region20: #{tpu_custom_call.1} parent=1 // pred_region
      %65 = dma.done [#allocation5], 256
    $region21: #{tpu_custom_call.1} parent=1 // pred_fallthru
      _
    %66 = vsyncpa [#allocation4], 1
    %67 = vsyncpa [#allocation5], 1

</llo_original>
